<compile_context>
chip_gen: v5e
topology: v5e:2x2
jax: 0.10.0
libtpu: 0.0.40
codegen_flags: <defaults>
</compile_context>

<pallas_src>
import jax
import jax.numpy as jnp
from jax.experimental import pallas as pl
from jax.experimental.pallas import tpu as pltpu


_VMEM_LIMIT = 48 * 1024 * 1024   # scoped-VMEM limit: safe on v5e/v6e (128 MiB) and v7x (64 MiB)
_VMEM_BUDGET = 40 * 1024 * 1024  # planning budget (headroom under the limit)


def _round_up(x, m):
    return ((x + m - 1) // m) * m


def _largest_div_tile(total, target, quantum=128):
    """Largest multiple of `quantum` that divides `total` and is <= target.
    `total` must already be a multiple of `quantum`."""
    best = quantum
    t = quantum
    while t <= min(total, target):
        if total % t == 0:
            best = t
        t += quantum
    return best


# ---------------------------------------------------------------------------
# Kernels
# ---------------------------------------------------------------------------
def _ffn_kernel_resident(x_ref, w1_ref, b1_ref, w2_ref, b2_ref, o_ref):
    # x_ref : (tm, Dp) native dtype      w1_ref: (Dp, Fp) bf16   b1_ref: (1, Fp) f32
    # w2_ref: (Fp, Dp) bf16              b2_ref: (1, Dp)  f32    o_ref : (tm, Dp)
    x = x_ref[...].astype(w1_ref.dtype)                    # cast in-kernel (VPU)
    h = jnp.dot(x, w1_ref[...], preferred_element_type=jnp.float32)
    h = jnp.maximum(h + b1_ref[...], 0.0)
    # TODO(synk): dropout omitted (inference / eval semantics -> identity).
    out = jnp.dot(h.astype(w2_ref.dtype), w2_ref[...],
                  preferred_element_type=jnp.float32)
    o_ref[...] = (out + b2_ref[...]).astype(o_ref.dtype)


def _ffn_kernel_tiled(x_ref, w1_ref, b1_ref, w2_ref, b2_ref, o_ref, acc_ref):
    # Same as above but d_ff is chunked along grid axis 1 ("arbitrary"),
    # partial products accumulated in an f32 VMEM scratch.
    k = pl.program_id(1)

    x = x_ref[...].astype(w1_ref.dtype)
    h = jnp.dot(x, w1_ref[...], preferred_element_type=jnp.float32)
    h = jnp.maximum(h + b1_ref[...], 0.0)
    # TODO(synk): dropout omitted (inference / eval semantics -> identity).
    partial = jnp.dot(h.astype(w2_ref.dtype), w2_ref[...],
                      preferred_element_type=jnp.float32)

    @pl.when(k == 0)
    def _():
        acc_ref[...] = partial          # write-on-first (no zero + add pass)

    @pl.when(k > 0)
    def _():
        acc_ref[...] += partial

    @pl.when(k == pl.num_programs(1) - 1)
    def _():
        o_ref[...] = (acc_ref[...] + b2_ref[...]).astype(o_ref.dtype)


# ---------------------------------------------------------------------------
# Parameter preparation (do ONCE at init, reuse for every forward call)
# ---------------------------------------------------------------------------
def prepare_ffn_params(w1, b1, w2, b2, compute_dtype=jnp.bfloat16):
    """Pad feature dims to multiples of 128 and cast weights to the MXU dtype.

    w1 : [d_model, d_ff]  (== nn.Linear(d_model, d_ff).weight.T)
    b1 : [d_ff]
    w2 : [d_ff, d_model]  (== nn.Linear(d_ff, d_model).weight.T)
    b2 : [d_model]
    """
    d_model, d_ff = w1.shape
    d_model_p = _round_up(d_model, 128)
    d_ff_p = _round_up(d_ff, 128)
    w1p = jnp.pad(w1, ((0, d_model_p - d_model),
                       (0, d_ff_p - d_ff))).astype(compute_dtype)
    w2p = jnp.pad(w2, ((0, d_ff_p - d_ff),
                       (0, d_model_p - d_model))).astype(compute_dtype)
    b1p = jnp.pad(b1, (0, d_ff_p - d_ff)).reshape(1, d_ff_p).astype(jnp.float32)
    b2p = jnp.pad(b2, (0, d_model_p - d_model)).reshape(1, d_model_p).astype(jnp.float32)
    return dict(w1=w1p, b1=b1p, w2=w2p, b2=b2p,
                d_model=d_model, d_ff=d_ff,
                d_model_p=d_model_p, d_ff_p=d_ff_p)


# ---------------------------------------------------------------------------
# Forward
# ---------------------------------------------------------------------------
def positionwise_ffn(x, params, *, tm=None, tff=None, force_tiled=False):
    """x : [batch, seq, d_model]; params from prepare_ffn_params."""
    batch, seq, d_model_in = x.shape
    d_model = params["d_model"]
    d_model_p = params["d_model_p"]
    d_ff_p = params["d_ff_p"]
    assert d_model_in == d_model

    out_dtype = x.dtype
    n = batch * seq
    x_bytes = jnp.dtype(x.dtype).itemsize
    out_bytes = jnp.dtype(out_dtype).itemsize
    w_bytes = jnp.dtype(params["w1"].dtype).itemsize

    # ---- row-tile clamp: >=2 tiles when possible (v7x megacore), mult of 8
    def clamp_tm(t):
        t = min(t, _round_up(n, 8))
        if n >= 16:
            t = min(t, _round_up(-(-n // 2), 8))
        return max(8, _round_up(t, 8))

    # ---- conservative VMEM estimate for a candidate plan --------------------
    def vmem_estimate(tm_, tff_):
        w_buf = 2 * (2 * d_model_p * tff_ * w_bytes)       # W1+W2 chunk, double-buffered
        xo = 2 * tm_ * d_model_p * (x_bytes + out_bytes)   # x/out tiles, double-buffered
        h = tm_ * tff_ * 4                                 # f32 intermediate activation
        acc = tm_ * d_model_p * 4                          # f32 accumulator (tiled path)
        bias = 4 * (tff_ + d_model_p) * 4
        return w_buf + xo + h + acc + bias

    # ---- path selection ------------------------------------------------------
    tm_res = clamp_tm(256 if tm is None else tm)
    resident = (not force_tiled) and (vmem_estimate(tm_res, d_ff_p) <= _VMEM_BUDGET)

    if resident:
        tm_sel, tff_sel = tm_res, d_ff_p
    else:
        tm_sel = clamp_tm(512 if tm is None else tm)
        tff_sel = _largest_div_tile(d_ff_p, 1024 if tff is None else tff)
        while vmem_estimate(tm_sel, tff_sel) > _VMEM_BUDGET:
            if tff_sel > 128:
                tff_sel = _largest_div_tile(d_ff_p, tff_sel // 2)
            elif tm_sel > 8:
                tm_sel = max(8, _round_up(tm_sel // 2, 8))
            else:
                break

    n_p = _round_up(n, tm_sel)
    n_row_tiles = n_p // tm_sel
    k_tiles = d_ff_p // tff_sel

    # ---- pad x (no cast here; cast happens inside the kernel) ---------------
    x2d = x.reshape(n, d_model)
    if (n_p - n) or (d_model_p - d_model):
        x2d = jnp.pad(x2d, ((0, n_p - n), (0, d_model_p - d_model)))

    # ---- advisory cost estimate ---------------------------------------------
    w_total_bytes = 2 * d_model_p * d_ff_p * w_bytes
    weight_passes = 1 if resident else n_row_tiles
    cost = pl.CostEstimate(
        flops=4 * n_p * d_model_p * d_ff_p,
        transcendentals=0,
        bytes_accessed=(n_p * d_model_p * (x_bytes + out_bytes)
                        + weight_passes * w_total_bytes),
    )

    if resident:
        out2d = pl.pallas_call(
            _ffn_kernel_resident,
            out_shape=jax.ShapeDtypeStruct((n_p, d_model_p), out_dtype),
            grid_spec=pltpu.PrefetchScalarGridSpec(
                num_scalar_prefetch=0,
                grid=(n_row_tiles,),
                in_specs=[
                    pl.BlockSpec((tm_sel, d_model_p), lambda i: (i, 0)),     # x rows
                    pl.BlockSpec((d_model_p, d_ff_p), lambda i: (0, 0)),     # W1 (resident)
                    pl.BlockSpec((1, d_ff_p), lambda i: (0, 0)),             # b1
                    pl.BlockSpec((d_ff_p, d_model_p), lambda i: (0, 0)),     # W2 (resident)
                    pl.BlockSpec((1, d_model_p), lambda i: (0, 0)),          # b2
                ],
                out_specs=pl.BlockSpec((tm_sel, d_model_p), lambda i: (i, 0)),
            ),
            compiler_params=pltpu.CompilerParams(
                dimension_semantics=("parallel",),
                vmem_limit_bytes=_VMEM_LIMIT,
            ),
            cost_estimate=cost,
        )(x2d, params["w1"], params["b1"], params["w2"], params["b2"])
    else:
        out2d = pl.pallas_call(
            _ffn_kernel_tiled,
            out_shape=jax.ShapeDtypeStruct((n_p, d_model_p), out_dtype),
            grid_spec=pltpu.PrefetchScalarGridSpec(
                num_scalar_prefetch=0,
                grid=(n_row_tiles, k_tiles),
                in_specs=[
                    pl.BlockSpec((tm_sel, d_model_p), lambda i, k: (i, 0)),   # x rows
                    pl.BlockSpec((d_model_p, tff_sel), lambda i, k: (0, k)),  # W1 chunk
                    pl.BlockSpec((1, tff_sel), lambda i, k: (0, k)),          # b1 chunk
                    pl.BlockSpec((tff_sel, d_model_p), lambda i, k: (k, 0)),  # W2 chunk
                    pl.BlockSpec((1, d_model_p), lambda i, k: (0, 0)),        # b2
                ],
                out_specs=pl.BlockSpec((tm_sel, d_model_p), lambda i, k: (i, 0)),
                scratch_shapes=[pltpu.VMEM((tm_sel, d_model_p), jnp.float32)],
            ),
            compiler_params=pltpu.CompilerParams(
                dimension_semantics=("parallel", "arbitrary"),
                vmem_limit_bytes=_VMEM_LIMIT,
            ),
            cost_estimate=cost,
        )(x2d, params["w1"], params["b1"], params["w2"], params["b2"])

    return out2d[:n, :d_model].reshape(batch, seq, d_model)


# ---------------------------------------------------------------------------
if __name__ == "__main__":
    # Small shapes consistent with the module's forward: [batch, seq, d_model]
    batch, seq, d_model, d_ff = 2, 8, 32, 256

    key = jax.random.PRNGKey(0)
    kx, kw1, kb1, kw2, kb2 = jax.random.split(key, 5)

    x = jax.random.normal(kx, (batch, seq, d_model), dtype=jnp.float32)

    # Deterministic param init (uniform, Linear-style scale).
    lim1 = 1.0 / (d_model ** 0.5)
    lim2 = 1.0 / (d_ff ** 0.5)
    w1 = jax.random.uniform(kw1, (d_model, d_ff), jnp.float32, -lim1, lim1)
    b1 = jax.random.uniform(kb1, (d_ff,), jnp.float32, -lim1, lim1)
    w2 = jax.random.uniform(kw2, (d_ff, d_model), jnp.float32, -lim2, lim2)
    b2 = jax.random.uniform(kb2, (d_model,), jnp.float32, -lim2, lim2)

    # Pad + cast weights ONCE (hoisted out of the per-call path).
    params = prepare_ffn_params(w1, b1, w2, b2)

    # Pure-JAX f32 reference; kernel uses bf16 MXU inputs with f32 accumulation.
    ref = jnp.maximum(x @ w1 + b1, 0.0) @ w2 + b2

    # Path 1: resident-weight kernel (weights fit VMEM -> d_ff axis collapsed).
    out = positionwise_ffn(x, params)
    jax.block_until_ready(out)
    assert out.shape == (batch, seq, d_model)
    assert jnp.allclose(out, ref, atol=5e-2, rtol=5e-2), (
        float(jnp.max(jnp.abs(out - ref))))

    # Path 2: exercise the d_ff-tiled accumulator path too (forced, tff=128).
    out_t = positionwise_ffn(x, params, force_tiled=True, tff=128)
    jax.block_until_ready(out_t)
    assert jnp.allclose(out_t, ref, atol=5e-2, rtol=5e-2), (
        float(jnp.max(jnp.abs(out_t - ref))))

    print("KERNEL_OK")
</pallas_src>

<mosaic_0001>
module attributes {stable_mosaic.version = 11 : i64} {
  func.func @_ffn_kernel_resident(%arg0: i32, %arg1: memref<8x128xf32, #tpu.memory_space<vmem>>, %arg2: memref<128x256xbf16, #tpu.memory_space<vmem>>, %arg3: memref<1x256xf32, #tpu.memory_space<vmem>>, %arg4: memref<256x128xbf16, #tpu.memory_space<vmem>>, %arg5: memref<1x128xf32, #tpu.memory_space<vmem>>, %arg6: memref<8x128xf32, #tpu.memory_space<vmem>>) attributes {dimension_semantics = [#tpu.dimension_semantics<parallel>], iteration_bounds = array<i64: 2>, scalar_prefetch = 0 : i64, scratch_operands = 0 : i64, tpu.core_type = #tpu.core_type<tc>, window_params = [{transform_indices = @transform_0, window_bounds = array<i64: 8, 128>}, {pipeline_mode = #tpu.pipeline_mode<synchronous>, transform_indices = @transform_1, window_bounds = array<i64: 128, 256>}, {pipeline_mode = #tpu.pipeline_mode<synchronous>, transform_indices = @transform_2, window_bounds = array<i64: 1, 256>}, {pipeline_mode = #tpu.pipeline_mode<synchronous>, transform_indices = @transform_3, window_bounds = array<i64: 256, 128>}, {pipeline_mode = #tpu.pipeline_mode<synchronous>, transform_indices = @transform_4, window_bounds = array<i64: 1, 128>}, {transform_indices = @transform_5, window_bounds = array<i64: 8, 128>}]} {
    %c0 = arith.constant 0 : index
    %c0_0 = arith.constant 0 : index
    %0 = vector.load %arg1[%c0, %c0_0] : memref<8x128xf32, #tpu.memory_space<vmem>>, vector<8x128xf32>
    %1 = arith.truncf %0 : vector<8x128xf32> to vector<8x128xbf16>
    %c0_1 = arith.constant 0 : index
    %c0_2 = arith.constant 0 : index
    %2 = vector.load %arg2[%c0_1, %c0_2] : memref<128x256xbf16, #tpu.memory_space<vmem>>, vector<128x256xbf16>
    %cst = arith.constant dense<0.000000e+00> : vector<8x256xf32>
    %3 = tpu.matmul %1, %2, %cst {dimension_numbers = #tpu.dot_dimension_numbers<[1], [0], [0], [1], [0, 0, 1, 1], [], []>} : vector<8x128xbf16>, vector<128x256xbf16>, vector<8x256xf32> -> vector<8x256xf32>
    %c0_3 = arith.constant 0 : index
    %c0_4 = arith.constant 0 : index
    %4 = vector.load %arg3[%c0_3, %c0_4] : memref<1x256xf32, #tpu.memory_space<vmem>>, vector<1x256xf32>
    %5 = vector.broadcast %4 : vector<1x256xf32> to vector<8x256xf32>
    %6 = arith.addf %3, %5 : vector<8x256xf32>
    %cst_5 = arith.constant 0.000000e+00 : f32
    %7 = vector.broadcast %cst_5 : f32 to vector<8x256xf32>
    %8 = arith.maximumf %6, %7 : vector<8x256xf32>
    %9 = arith.truncf %8 : vector<8x256xf32> to vector<8x256xbf16>
    %c0_6 = arith.constant 0 : index
    %c0_7 = arith.constant 0 : index
    %10 = vector.load %arg4[%c0_6, %c0_7] : memref<256x128xbf16, #tpu.memory_space<vmem>>, vector<256x128xbf16>
    %cst_8 = arith.constant dense<0.000000e+00> : vector<8x128xf32>
    %11 = tpu.matmul %9, %10, %cst_8 {dimension_numbers = #tpu.dot_dimension_numbers<[1], [0], [0], [1], [0, 0, 1, 1], [], []>} : vector<8x256xbf16>, vector<256x128xbf16>, vector<8x128xf32> -> vector<8x128xf32>
    %c0_9 = arith.constant 0 : index
    %c0_10 = arith.constant 0 : index
    %12 = vector.load %arg5[%c0_9, %c0_10] : memref<1x128xf32, #tpu.memory_space<vmem>>, vector<1x128xf32>
    %13 = vector.broadcast %12 : vector<1x128xf32> to vector<8x128xf32>
    %14 = arith.addf %11, %13 : vector<8x128xf32>
    %c0_11 = arith.constant 0 : index
    %c0_12 = arith.constant 0 : index
    %15 = vector.load %arg6[%c0_11, %c0_12] : memref<8x128xf32, #tpu.memory_space<vmem>>, vector<8x128xf32>
    tpu.vector_store %arg6[%c0_11, %c0_12], %14 {strides = array<i32>} : memref<8x128xf32, #tpu.memory_space<vmem>>, vector<8x128xf32>,
    return
  }
  func.func @transform_0(%arg0: i32) -> (i32, i32) {
    %c0_i32 = arith.constant 0 : i32
    %c0_i32_0 = arith.constant 0 : i32
    return %arg0, %c0_i32 : i32, i32
  }
  func.func @transform_1(%arg0: i32) -> (i32, i32) {
    %c0_i32 = arith.constant 0 : i32
    %c0_i32_0 = arith.constant 0 : i32
    %c0_i32_1 = arith.constant 0 : i32
    return %c0_i32, %c0_i32_0 : i32, i32
  }
  func.func @transform_2(%arg0: i32) -> (i32, i32) {
    %c0_i32 = arith.constant 0 : i32
    %c0_i32_0 = arith.constant 0 : i32
    %c0_i32_1 = arith.constant 0 : i32
    return %c0_i32, %c0_i32_0 : i32, i32
  }
  func.func @transform_3(%arg0: i32) -> (i32, i32) {
    %c0_i32 = arith.constant 0 : i32
    %c0_i32_0 = arith.constant 0 : i32
    %c0_i32_1 = arith.constant 0 : i32
    return %c0_i32, %c0_i32_0 : i32, i32
  }
  func.func @transform_4(%arg0: i32) -> (i32, i32) {
    %c0_i32 = arith.constant 0 : i32
    %c0_i32_0 = arith.constant 0 : i32
    %c0_i32_1 = arith.constant 0 : i32
    return %c0_i32, %c0_i32_0 : i32, i32
  }
  func.func @transform_5(%arg0: i32) -> (i32, i32) {
    %c0_i32 = arith.constant 0 : i32
    %c0_i32_0 = arith.constant 0 : i32
    return %arg0, %c0_i32 : i32, i32
  }
}

</mosaic_0001>

<llo_original>
// kernel: tpu_custom_call.1
$region0: #{tpu_custom_call.1}
  #allocation0 [shape = 'u32[]', space=smem, size = 0x4, offset = 0x4, fixed_abs, tag = 'smem constant byte address 0x4 - core index']
  #allocation1 [shape = 'u32[72,128]{1,0:T(1,128)}', space=vmem, size = 0x9000, scoped, tag = 'internal scratch']
  %s0 = inlined_call_operand.hbm [shape: f32[16,128], index: 0, kind: input, shape index: {}]
  %s1 = inlined_call_operand.hbm [shape: bf16[128,256], index: 1, kind: input, shape index: {}]
  %s2 = inlined_call_operand.hbm [shape: f32[1,256], index: 2, kind: input, shape index: {}]
  %s3 = inlined_call_operand.hbm [shape: bf16[256,128], index: 3, kind: input, shape index: {}]
  %s4 = inlined_call_operand.vmem [shape: f32[1,128], index: 4, kind: input, shape index: {}]
  %s5 = inlined_call_operand.hbm [shape: f32[16,128], index: 5, kind: output, shape index: {}]
  %s6 = sld [smem:[#allocation0]]
  $region69: #{tpu_custom_call.1} parent=0
    _
  %s8 = ssub.s32 1, %s6
  %s9 = scalar_select 0, %s8, %s6
  $region1: #{tpu_custom_call.1} parent=0
    #allocation2 [shape = 'u8[8192]{0}', space=vmem, size = 0x2000, scoped, tag = 'input window, operand 0']
    #allocation3 [shape = 's32[2]{0}', space=sflag, size = 0x8, scoped, tag = 'scoped memory for tpu_custom_call.1']
    #allocation4 [shape = 's32[2]{0}', space=sflag, size = 0x8, scoped, tag = 'scoped memory for tpu_custom_call.1']
    #allocation5 [shape = 'u8[65536]{0}', space=vmem, size = 0x10000, scoped, tag = 'input window, operand 1, single buffered']
    #allocation6 [shape = 's32[1]{0}', space=sflag, size = 0x4, scoped, tag = 'scoped memory for tpu_custom_call.1']
    #allocation7 [shape = 'u8[1024]{0}', space=vmem, size = 0x400, scoped, tag = 'input window, operand 2, single buffered']
    #allocation8 [shape = 'u8[65536]{0}', space=vmem, size = 0x10000, scoped, tag = 'input window, operand 3, single buffered']
    #allocation9 [shape = 's32[1]{0}', space=sflag, size = 0x4, scoped, tag = 'scoped memory for tpu_custom_call.1']
    #allocation10 [shape = 'u8[8192]{0}', space=vmem, size = 0x2000, scoped, tag = 'output window, operand 0']
    %10 = vsyncpa [#allocation3], 0
    %s11 = scalar_lea.sflag [#allocation3], 1
    %12 = vsyncpa %s11, 0
    %13 = vsyncpa [#allocation6], 0
    %14 = vsyncpa [#allocation9], 0
    %15 = vsyncpa [#allocation4], 0
    %s16 = scalar_lea.sflag [#allocation4], 1
    %17 = vsyncpa %s16, 0
    loop: start=0, step=1, limit=4
    $region2: #{tpu_custom_call.1} parent=1 // loop_pre_header
      _
    $region3: #{tpu_custom_call.1} parent=1 // loop_header
      %s19 = sphi 0, %s23
      %p20 = scmp.ge.s32.totalorder %s19, 4
      %s29 = sphi 0, %s31
      %s32 = sphi 0, %s29
      %s33 = sphi 0, %s32
      %s49 = sphi 0, %s33
      %s53 = sphi 0, %s53
      %s55 = sphi 0, %s53
      %s56 = sphi 0, %s55
      %s70 = sphi 0, %s56
      %s74 = sphi 0, %s74
      %s76 = sphi 0, %s74
      %s77 = sphi 0, %s76
      %s91 = sphi 0, %s77
      %s95 = sphi 0, %s95
      %s97 = sphi 0, %s95
      %s98 = sphi 0, %s97
      %s112 = sphi 0, %s98
      %s116 = sphi 0, %s116
      %s118 = sphi 0, %s116
      %s119 = sphi 0, %s118
      %s133 = sphi 0, %s119
      %s139 = sphi 0, %s141
      %s142 = sphi 0, %s139
      %s143 = sphi 0, %s142
      %s159 = sphi 0, %s143
    $region4: #{tpu_custom_call.1} parent=1 // loop_header_branch
      %22 = sbr.rel (%p20) target = $region8
    $region5: #{tpu_custom_call.1} parent=1 // loop_body
      %s24 = ssub.s32 %s19, 1
      %s25 = ssub.s32 %s19, 2
      %s26 = sadd.s32 %s19, 1
      %s27 = ssub.s32 %s19, %s26
      %p28 = scmp.eq.s32.totalorder %s27, 0
      %s30 = sadd.s32 %s29, 1
      %s31 = scalar_select %p28, %s29, %s30
      %p34 = pneg %p28
      %p35 = scmp.eq.s32.totalorder %s19, 1
      %p36 = por %p34, %p35
      %p37 = scmp.ne.s32.totalorder %s29, %s32
      %p38 = scmp.eq.s32.totalorder %s19, 0
      %p39 = por %p37, %p38
      %p40 = scmp.ne.s32.totalorder %s29, %s32
      %p41 = scmp.eq.s32.totalorder %s24, 1
      %p42 = por %p40, %p41
      %p43 = scmp.ne.s32.totalorder %s32, %s33
      %p44 = scmp.eq.s32.totalorder %s24, 0
      %p45 = por %p43, %p44
      %p46 = scmp.ne.s32.totalorder %s32, %s33
      %p47 = scmp.eq.s32.totalorder %s25, 1
      %p48 = por %p46, %p47
      %p50 = scmp.ne.s32.totalorder %s33, %s49
      %p51 = scmp.eq.s32.totalorder %s25, 0
      %p52 = por %p50, %p51
      %s54 = sadd.s32 %s53, 1
      %p57 = scmp.eq.s32.totalorder %s19, 1
      %p58 = scmp.ne.s32.totalorder %s53, %s55
      %p59 = scmp.eq.s32.totalorder %s19, 0
      %p60 = por %p58, %p59
      %p61 = scmp.ne.s32.totalorder %s53, %s55
      %p62 = scmp.eq.s32.totalorder %s24, 1
      %p63 = por %p61, %p62
      %p64 = scmp.ne.s32.totalorder %s55, %s56
      %p65 = scmp.eq.s32.totalorder %s24, 0
      %p66 = por %p64, %p65
      %p67 = scmp.ne.s32.totalorder %s55, %s56
      %p68 = scmp.eq.s32.totalorder %s25, 1
      %p69 = por %p67, %p68
      %p71 = scmp.ne.s32.totalorder %s56, %s70
      %p72 = scmp.eq.s32.totalorder %s25, 0
      %p73 = por %p71, %p72
      %s75 = sadd.s32 %s74, 1
      %p78 = scmp.eq.s32.totalorder %s19, 1
      %p79 = scmp.ne.s32.totalorder %s74, %s76
      %p80 = scmp.eq.s32.totalorder %s19, 0
      %p81 = por %p79, %p80
      %p82 = scmp.ne.s32.totalorder %s74, %s76
      %p83 = scmp.eq.s32.totalorder %s24, 1
      %p84 = por %p82, %p83
      %p85 = scmp.ne.s32.totalorder %s76, %s77
      %p86 = scmp.eq.s32.totalorder %s24, 0
      %p87 = por %p85, %p86
      %p88 = scmp.ne.s32.totalorder %s76, %s77
      %p89 = scmp.eq.s32.totalorder %s25, 1
      %p90 = por %p88, %p89
      %p92 = scmp.ne.s32.totalorder %s77, %s91
      %p93 = scmp.eq.s32.totalorder %s25, 0
      %p94 = por %p92, %p93
      %s96 = sadd.s32 %s95, 1
      %p99 = scmp.eq.s32.totalorder %s19, 1
      %p100 = scmp.ne.s32.totalorder %s95, %s97
      %p101 = scmp.eq.s32.totalorder %s19, 0
      %p102 = por %p100, %p101
      %p103 = scmp.ne.s32.totalorder %s95, %s97
      %p104 = scmp.eq.s32.totalorder %s24, 1
      %p105 = por %p103, %p104
      %p106 = scmp.ne.s32.totalorder %s97, %s98
      %p107 = scmp.eq.s32.totalorder %s24, 0
      %p108 = por %p106, %p107
      %p109 = scmp.ne.s32.totalorder %s97, %s98
      %p110 = scmp.eq.s32.totalorder %s25, 1
      %p111 = por %p109, %p110
      %p113 = scmp.ne.s32.totalorder %s98, %s112
      %p114 = scmp.eq.s32.totalorder %s25, 0
      %p115 = por %p113, %p114
      %s117 = sadd.s32 %s116, 1
      %p120 = scmp.eq.s32.totalorder %s19, 1
      %p121 = scmp.ne.s32.totalorder %s116, %s118
      %p122 = scmp.eq.s32.totalorder %s19, 0
      %p123 = por %p121, %p122
      %p124 = scmp.ne.s32.totalorder %s116, %s118
      %p125 = scmp.eq.s32.totalorder %s24, 1
      %p126 = por %p124, %p125
      %p127 = scmp.ne.s32.totalorder %s118, %s119
      %p128 = scmp.eq.s32.totalorder %s24, 0
      %p129 = por %p127, %p128
      %p130 = scmp.ne.s32.totalorder %s118, %s119
      %p131 = scmp.eq.s32.totalorder %s25, 1
      %p132 = por %p130, %p131
      %p134 = scmp.ne.s32.totalorder %s119, %s133
      %p135 = scmp.eq.s32.totalorder %s25, 0
      %p136 = por %p134, %p135
      %s137 = ssub.s32 %s19, %s26
      %p138 = scmp.eq.s32.totalorder %s137, 0
      %s140 = sadd.s32 %s139, 1
      %s141 = scalar_select %p138, %s139, %s140
      %p144 = pneg %p138
      %p145 = scmp.eq.s32.totalorder %s19, 1
      %p146 = por %p144, %p145
      %p147 = scmp.ne.s32.totalorder %s139, %s142
      %p148 = scmp.eq.s32.totalorder %s19, 0
      %p149 = por %p147, %p148
      %p150 = scmp.ne.s32.totalorder %s139, %s142
      %p151 = scmp.eq.s32.totalorder %s24, 1
      %p152 = por %p150, %p151
      %p153 = scmp.ne.s32.totalorder %s142, %s143
      %p154 = scmp.eq.s32.totalorder %s24, 0
      %p155 = por %p153, %p154
      %p156 = scmp.ne.s32.totalorder %s142, %s143
      %p157 = scmp.eq.s32.totalorder %s25, 1
      %p158 = por %p156, %p157
      %p160 = scmp.ne.s32.totalorder %s143, %s159
      %p161 = scmp.eq.s32.totalorder %s25, 0
      %p162 = por %p160, %p161
      %p163 = scmp.le.s32.totalorder 1, %s19
      %p164 = scmp.lt.s32.totalorder %s19, 3
      %p165 = pnand %p163, %p164
      %p166 = pneg %p165
      // Predicated region
      $region9: #{tpu_custom_call.1} parent=5 // pred_check
        _
      $region10: #{tpu_custom_call.1} parent=5 // pred_check_branch
        %168 = sbr.rel (%p165) target = $region12
      $region11: #{tpu_custom_call.1} parent=5 // pred_region
        %s169 = ssub.s32 %s19, 1
        // Predicated region
        $region13: #{tpu_custom_call.1} parent=11 // pred_check
          %p170 = pneg %p66
        $region14: #{tpu_custom_call.1} parent=11 // pred_check_branch
          %172 = sbr.rel (%p170) target = $region16
        $region15: #{tpu_custom_call.1} parent=11 // pred_region
          %174 = vsyncadd [#allocation6], 0
          %s175 = sshll.u32 %s1, 4
          %s176 = int_to_ptr.hbm [resolvable:$true] %s175
          %s177 = sshll.u32 [#allocation5], 4
          %s178 = int_to_ptr.vmem [resolvable:$true] %s177
          %183 = dma.hbm_to_vmem [thread:$0]  %s176, 2048, %s178, [#allocation6], 128, 128, 8
        $region16: #{tpu_custom_call.1} parent=11 // pred_fallthru
          _
        // Predicated region
        $region17: #{tpu_custom_call.1} parent=11 // pred_check
          %p184 = pneg %p87
        $region18: #{tpu_custom_call.1} parent=11 // pred_check_branch
          %186 = sbr.rel (%p184) target = $region20
        $region19: #{tpu_custom_call.1} parent=11 // pred_region
          %188 = vsyncadd [#allocation6], 0
          %s190 = sshll.u32 %s2, 4
          %s191 = int_to_ptr.hbm [resolvable:$true] %s190
          %s192 = sshll.u32 [#allocation7], 4
          %s193 = int_to_ptr.vmem [resolvable:$true] %s192
          %195 = dma.hbm_to_vmem [thread:$0]  %s191, 32, %s193, [#allocation6]
        $region20: #{tpu_custom_call.1} parent=11 // pred_fallthru
          _
        // Predicated region
        $region21: #{tpu_custom_call.1} parent=11 // pred_check
          %p196 = pneg %p108
        $region22: #{tpu_custom_call.1} parent=11 // pred_check_branch
          %198 = sbr.rel (%p196) target = $region24
        $region23: #{tpu_custom_call.1} parent=11 // pred_region
          %200 = vsyncadd [#allocation9], 0
          %s201 = sshll.u32 %s3, 4
          %s202 = int_to_ptr.hbm [resolvable:$true] %s201
          %s203 = sshll.u32 [#allocation8], 4
          %s204 = int_to_ptr.vmem [resolvable:$true] %s203
          %209 = dma.hbm_to_vmem [thread:$0]  %s202, 2048, %s204, [#allocation9], 64, 64, 4
        $region24: #{tpu_custom_call.1} parent=11 // pred_fallthru
          _
        // Predicated region
        $region25: #{tpu_custom_call.1} parent=11 // pred_check
          %p210 = pneg %p129
        $region26: #{tpu_custom_call.1} parent=11 // pred_check_branch
          %212 = sbr.rel (%p210) target = $region28
        $region27: #{tpu_custom_call.1} parent=11 // pred_region
          _
        $region28: #{tpu_custom_call.1} parent=11 // pred_fallthru
          _
      $region12: #{tpu_custom_call.1} parent=5 // pred_fallthru
        _
      %p213 = scmp.lt.s32.totalorder %s19, 2
      // Predicated region
      $region29: #{tpu_custom_call.1} parent=5 // pred_check
        %p214 = pneg %p213
      $region30: #{tpu_custom_call.1} parent=5 // pred_check_branch
        %216 = sbr.rel (%p214) target = $region32
      $region31: #{tpu_custom_call.1} parent=5 // pred_region
        // Predicated region
        $region33: #{tpu_custom_call.1} parent=31 // pred_check
          %p217 = pneg %p39
        $region34: #{tpu_custom_call.1} parent=31 // pred_check_branch
          %219 = sbr.rel (%p217) target = $region36
        $region35: #{tpu_custom_call.1} parent=31 // pred_region
          %s220 = sand.u32 %s29, 1
          %s221 = scalar_lea.sflag [#allocation3], %s220
          %s222 = sand.u32 %s29, 1
          %s223 = smul.addr %s222, 8
          %s224 = scalar_lea.vmem [#allocation2], %s223
          %226 = vsyncadd %s221, 0
          %s227 = smul.addr %s19, 8
          %s228 = scalar_lea.hbm %s0, %s227
          %s230 = sshll.u32 %s228, 4
          %s231 = int_to_ptr.hbm [resolvable:$true] %s230
          %s232 = sshll.u32 %s224, 4
          %s233 = int_to_ptr.vmem [resolvable:$true] %s232
          %235 = dma.hbm_to_vmem [thread:$0]  %s231, 128, %s233, %s221
        $region36: #{tpu_custom_call.1} parent=31 // pred_fallthru
          _
      $region32: #{tpu_custom_call.1} parent=5 // pred_fallthru
        _
      %p236 = scmp.le.s32.totalorder 1, %s19
      %p237 = scmp.lt.s32.totalorder %s19, 3
      %p238 = pnand %p236, %p237
      %p239 = pneg %p238
      // Predicated region
      $region37: #{tpu_custom_call.1} parent=5 // pred_check
        _
      $region38: #{tpu_custom_call.1} parent=5 // pred_check_branch
        %241 = sbr.rel (%p238) target = $region40
      $region39: #{tpu_custom_call.1} parent=5 // pred_region
        %s242 = ssub.s32 %s19, 1
        %s243 = sand.u32 %s32, 1
        %s244 = scalar_lea.sflag [#allocation3], %s243
        %s245 = sand.u32 %s32, 1
        %s246 = smul.addr %s245, 8
        %s247 = scalar_lea.vmem [#allocation2], %s246
        // Predicated region
        $region41: #{tpu_custom_call.1} parent=39 // pred_check
          %p248 = pneg %p45
        $region42: #{tpu_custom_call.1} parent=39 // pred_check_branch
          %250 = sbr.rel (%p248) target = $region44
        $region43: #{tpu_custom_call.1} parent=39 // pred_region
          %252 = dma.done %s244, 128
        $region44: #{tpu_custom_call.1} parent=39 // pred_fallthru
          _
        // Predicated region
        $region45: #{tpu_custom_call.1} parent=39 // pred_check
          %p253 = pneg %p66
        $region46: #{tpu_custom_call.1} parent=39 // pred_check_branch
          %255 = sbr.rel (%p253) target = $region48
        $region47: #{tpu_custom_call.1} parent=39 // pred_region
          %257 = dma.done [#allocation6], 2048
        $region48: #{tpu_custom_call.1} parent=39 // pred_fallthru
          _
        // Predicated region
        $region49: #{tpu_custom_call.1} parent=39 // pred_check
          %p258 = pneg %p87
        $region50: #{tpu_custom_call.1} parent=39 // pred_check_branch
          %260 = sbr.rel (%p258) target = $region52
        $region51: #{tpu_custom_call.1} parent=39 // pred_region
          %262 = dma.done [#allocation6], 32
        $region52: #{tpu_custom_call.1} parent=39 // pred_fallthru
          _
        // Predicated region
        $region53: #{tpu_custom_call.1} parent=39 // pred_check
          %p263 = pneg %p108
        $region54: #{tpu_custom_call.1} parent=39 // pred_check_branch
          %265 = sbr.rel (%p263) target = $region56
        $region55: #{tpu_custom_call.1} parent=39 // pred_region
          %267 = dma.done [#allocation9], 2048
        $region56: #{tpu_custom_call.1} parent=39 // pred_fallthru
          _
        %s268 = sand.u32 %s32, 1
        %s269 = scalar_lea.sflag [#allocation3], %s268
        %s270 = sand.u32 %s32, 1
        %s271 = smul.addr %s270, 8
        %s272 = scalar_lea.vmem [#allocation2], %s271
        %p273 = pneg %p45
        %p274 = pneg %p42
        %p275 = pneg %p66
        %p276 = pneg %p63
        %p277 = pneg %p87
        %p278 = pneg %p84
        %p279 = pneg %p108
        %p280 = pneg %p105
        %p281 = pneg %p129
        %p282 = pneg %p126
        %p283 = pneg %p155
        %p284 = pneg %p152
        %s285 = sand.u32 %s142, 1
        %s286 = scalar_lea.sflag [#allocation4], %s285
        %s287 = sand.u32 %s142, 1
        %s288 = smul.addr %s287, 8
        %s289 = scalar_lea.vmem [#allocation10], %s288
        %v290 = vld [vmem:[%s247] sm:$0xff]
        %v291 = vpack.c.bf16 %v290, %v290
        %v292 = vld [vmem:[#allocation5] sm:$0xff]
        %v293 = vld [vmem:[#allocation5 + $0x8] sm:$0xff]
        %v294 = vld [vmem:[#allocation5 + $0x10] sm:$0xff]
        %v295 = vld [vmem:[#allocation5 + $0x18] sm:$0xff]
        %v296 = vld [vmem:[#allocation5 + $0x20] sm:$0xff]
        %v297 = vld [vmem:[#allocation5 + $0x28] sm:$0xff]
        %v298 = vld [vmem:[#allocation5 + $0x30] sm:$0xff]
        %v299 = vld [vmem:[#allocation5 + $0x38] sm:$0xff]
        %v300 = vld [vmem:[#allocation5 + $0x40] sm:$0xff]
        %v301 = vld [vmem:[#allocation5 + $0x48] sm:$0xff]
        %v302 = vld [vmem:[#allocation5 + $0x50] sm:$0xff]
        %v303 = vld [vmem:[#allocation5 + $0x58] sm:$0xff]
        %v304 = vld [vmem:[#allocation5 + $0x60] sm:$0xff]
        %v305 = vld [vmem:[#allocation5 + $0x68] sm:$0xff]
        %v306 = vld [vmem:[#allocation5 + $0x70] sm:$0xff]
        %v307 = vld [vmem:[#allocation5 + $0x78] sm:$0xff]
        %v308 = vld [vmem:[#allocation7] sm:$0x3]
        %v310 = vperm.slane %v308, 0
        %v311 = vperm.slane %v308, 1
        %v330 = vunpack.c.l.b16 %v292
        %v331 = vunpack.c.h.b16 %v292
        %v332 = vunpack.c.l.b16 %v293
        %v333 = vunpack.c.h.b16 %v293
        %v334 = vunpack.c.l.b16 %v294
        %v335 = vunpack.c.h.b16 %v294
        %v336 = vunpack.c.l.b16 %v295
        %v337 = vunpack.c.h.b16 %v295
        %v338 = vunpack.c.l.b16 %v296
        %v339 = vunpack.c.h.b16 %v296
        %v340 = vunpack.c.l.b16 %v297
        %v341 = vunpack.c.h.b16 %v297
        %v342 = vunpack.c.l.b16 %v298
        %v343 = vunpack.c.h.b16 %v298
        %v344 = vunpack.c.l.b16 %v299
        %v345 = vunpack.c.h.b16 %v299
        %v346 = vunpack.c.l.b16 %v300
        %v347 = vunpack.c.h.b16 %v300
        %v348 = vunpack.c.l.b16 %v301
        %v349 = vunpack.c.h.b16 %v301
        %v350 = vunpack.c.l.b16 %v302
        %v351 = vunpack.c.h.b16 %v302
        %v352 = vunpack.c.l.b16 %v303
        %v353 = vunpack.c.h.b16 %v303
        %v354 = vunpack.c.l.b16 %v304
        %v355 = vunpack.c.h.b16 %v304
        %v356 = vunpack.c.l.b16 %v305
        %v357 = vunpack.c.h.b16 %v305
        %v358 = vunpack.c.l.b16 %v306
        %v359 = vunpack.c.h.b16 %v306
        %v360 = vunpack.c.l.b16 %v307
        %v361 = vunpack.c.h.b16 %v307
        %v362 = vpack.c.b16 %v332, %v330
        %v363 = vpack.c.b16 %v333, %v331
        %v364 = vpack.c.b16 %v336, %v334
        %v365 = vpack.c.b16 %v337, %v335
        %v366 = vpack.c.b16 %v340, %v338
        %v367 = vpack.c.b16 %v341, %v339
        %v368 = vpack.c.b16 %v344, %v342
        %v369 = vpack.c.b16 %v345, %v343
        %v370 = vpack.c.b16 %v348, %v346
        %v371 = vpack.c.b16 %v349, %v347
        %v372 = vpack.c.b16 %v352, %v350
        %v373 = vpack.c.b16 %v353, %v351
        %v374 = vpack.c.b16 %v356, %v354
        %v375 = vpack.c.b16 %v357, %v355
        %v376 = vpack.c.b16 %v360, %v358
        %v377 = vpack.c.b16 %v361, %v359
        %394 = vmatpush.bf16.msra.mxu0 %v376
        %395 = vmatpush.bf16.msra.mxu0 %v374
        %396 = vmatpush.bf16.msra.mxu0 %v372
        %397 = vmatpush.bf16.msra.mxu0 %v370
        %398 = vmatpush.bf16.msra.mxu0 %v368
        %399 = vmatpush.bf16.msra.mxu0 %v366
        %400 = vmatpush.bf16.msra.mxu0 %v364
        %401 = vmatpush.bf16.msra.mxu0 %v362
        %402 = vmatmul.bf16.gmra.mxu0 %v291
        %v403 = vpop.f32.mrf.mxu0
        %v404 = vadd.f32 %v310, %v403
        %v405 = vpop.f32.mrf.mxu0
        %406 = vdwg.mxu0
        %407 = vmatpush.bf16.msra.mxu0 %v377
        %408 = vmatpush.bf16.msra.mxu0 %v375
        %409 = vmatpush.bf16.msra.mxu0 %v373
        %410 = vmatpush.bf16.msra.mxu0 %v371
        %411 = vmatpush.bf16.msra.mxu0 %v369
        %412 = vmatpush.bf16.msra.mxu0 %v367
        %413 = vmatpush.bf16.msra.mxu0 %v365
        %414 = vmatpush.bf16.msra.mxu0 %v363
        %415 = vmatmul.bf16.gmra.mxu0 %v291
        %v416 = vpop.f32.mrf.mxu0
        %v417 = vadd.f32 %v311, %v416
        %v418 = vpop.f32.mrf.mxu0
        %419 = vdwg.mxu0
        %v420 = vmax.f32 %v404, 0.0
        %v421 = vmax.f32 %v417, 0.0
        %v422 = vpack.c.bf16 %v420, %v420
        %v423 = vpack.c.bf16 %v421, %v421
        %v424 = vld [vmem:[#allocation8] sm:$0xf]
        %v425 = vld [vmem:[#allocation8 + $0x4] sm:$0xf]
        %v426 = vld [vmem:[#allocation8 + $0x8] sm:$0xf]
        %v427 = vld [vmem:[#allocation8 + $0xc] sm:$0xf]
        %v428 = vld [vmem:[#allocation8 + $0x10] sm:$0xf]
        %v429 = vld [vmem:[#allocation8 + $0x14] sm:$0xf]
        %v430 = vld [vmem:[#allocation8 + $0x18] sm:$0xf]
        %v431 = vld [vmem:[#allocation8 + $0x1c] sm:$0xf]
        %v432 = vld [vmem:[#allocation8 + $0x20] sm:$0xf]
        %v433 = vld [vmem:[#allocation8 + $0x24] sm:$0xf]
        %v434 = vld [vmem:[#allocation8 + $0x28] sm:$0xf]
        %v435 = vld [vmem:[#allocation8 + $0x2c] sm:$0xf]
        %v436 = vld [vmem:[#allocation8 + $0x30] sm:$0xf]
        %v437 = vld [vmem:[#allocation8 + $0x34] sm:$0xf]
        %v438 = vld [vmem:[#allocation8 + $0x38] sm:$0xf]
        %v439 = vld [vmem:[#allocation8 + $0x3c] sm:$0xf]
        %v440 = vld [vmem:[#allocation8 + $0x40] sm:$0xf]
        %v441 = vld [vmem:[#allocation8 + $0x44] sm:$0xf]
        %v442 = vld [vmem:[#allocation8 + $0x48] sm:$0xf]
        %v443 = vld [vmem:[#allocation8 + $0x4c] sm:$0xf]
        %v444 = vld [vmem:[#allocation8 + $0x50] sm:$0xf]
        %v445 = vld [vmem:[#allocation8 + $0x54] sm:$0xf]
        %v446 = vld [vmem:[#allocation8 + $0x58] sm:$0xf]
        %v447 = vld [vmem:[#allocation8 + $0x5c] sm:$0xf]
        %v448 = vld [vmem:[#allocation8 + $0x60] sm:$0xf]
        %v449 = vld [vmem:[#allocation8 + $0x64] sm:$0xf]
        %v450 = vld [vmem:[#allocation8 + $0x68] sm:$0xf]
        %v451 = vld [vmem:[#allocation8 + $0x6c] sm:$0xf]
        %v452 = vld [vmem:[#allocation8 + $0x70] sm:$0xf]
        %v453 = vld [vmem:[#allocation8 + $0x74] sm:$0xf]
        %v454 = vld [vmem:[#allocation8 + $0x78] sm:$0xf]
        %v455 = vld [vmem:[#allocation8 + $0x7c] sm:$0xf]
        %v456 = vld [vmem:[%s4] sm:$0x1]
        %v458 = vperm.slane %v456, 0
        %v492 = vunpack.c.l.b16 %v424
        %v493 = vunpack.c.l.b16 %v425
        %v494 = vunpack.c.l.b16 %v426
        %v495 = vunpack.c.l.b16 %v427
        %v496 = vunpack.c.l.b16 %v428
        %v497 = vunpack.c.l.b16 %v429
        %v498 = vunpack.c.l.b16 %v430
        %v499 = vunpack.c.l.b16 %v431
        %v500 = vunpack.c.l.b16 %v432
        %v501 = vunpack.c.l.b16 %v433
        %v502 = vunpack.c.l.b16 %v434
        %v503 = vunpack.c.l.b16 %v435
        %v504 = vunpack.c.l.b16 %v436
        %v505 = vunpack.c.l.b16 %v437
        %v506 = vunpack.c.l.b16 %v438
        %v507 = vunpack.c.l.b16 %v439
        %v508 = vunpack.c.l.b16 %v440
        %v509 = vunpack.c.l.b16 %v441
        %v510 = vunpack.c.l.b16 %v442
        %v511 = vunpack.c.l.b16 %v443
        %v512 = vunpack.c.l.b16 %v444
        %v513 = vunpack.c.l.b16 %v445
        %v514 = vunpack.c.l.b16 %v446
        %v515 = vunpack.c.l.b16 %v447
        %v516 = vunpack.c.l.b16 %v448
        %v517 = vunpack.c.l.b16 %v449
        %v518 = vunpack.c.l.b16 %v450
        %v519 = vunpack.c.l.b16 %v451
        %v520 = vunpack.c.l.b16 %v452
        %v521 = vunpack.c.l.b16 %v453
        %v522 = vunpack.c.l.b16 %v454
        %v523 = vunpack.c.l.b16 %v455
        %v524 = vpack.c.b16 %v493, %v492
        %v525 = vpack.c.b16 %v495, %v494
        %v526 = vpack.c.b16 %v497, %v496
        %v527 = vpack.c.b16 %v499, %v498
        %v528 = vpack.c.b16 %v501, %v500
        %v529 = vpack.c.b16 %v503, %v502
        %v530 = vpack.c.b16 %v505, %v504
        %v531 = vpack.c.b16 %v507, %v506
        %v532 = vpack.c.b16 %v509, %v508
        %v533 = vpack.c.b16 %v511, %v510
        %v534 = vpack.c.b16 %v513, %v512
        %v535 = vpack.c.b16 %v515, %v514
        %v536 = vpack.c.b16 %v517, %v516
        %v537 = vpack.c.b16 %v519, %v518
        %v538 = vpack.c.b16 %v521, %v520
        %v539 = vpack.c.b16 %v523, %v522
        %556 = vmatpush.bf16.msra.mxu0 %v531
        %557 = vmatpush.bf16.msra.mxu0 %v530
        %558 = vmatpush.bf16.msra.mxu0 %v529
        %559 = vmatpush.bf16.msra.mxu0 %v528
        %560 = vmatpush.bf16.msra.mxu0 %v527
        %561 = vmatpush.bf16.msra.mxu0 %v526
        %562 = vmatpush.bf16.msra.mxu0 %v525
        %563 = vmatpush.bf16.msra.mxu0 %v524
        %564 = vmatmul.bf16.gmra.mxu0 %v422
        %v565 = vpop.f32.mrf.mxu0
        %v566 = vadd.f32 %v458, %v565
        %v567 = vpop.f32.mrf.mxu0
        %568 = vdwg.mxu0
        %569 = vmatpush.bf16.msra.mxu0 %v539
        %570 = vmatpush.bf16.msra.mxu0 %v538
        %571 = vmatpush.bf16.msra.mxu0 %v537
        %572 = vmatpush.bf16.msra.mxu0 %v536
        %573 = vmatpush.bf16.msra.mxu0 %v535
        %574 = vmatpush.bf16.msra.mxu0 %v534
        %575 = vmatpush.bf16.msra.mxu0 %v533
        %576 = vmatpush.bf16.msra.mxu0 %v532
        %577 = vmatmul.bf16.gmra.mxu0 %v423
        %v578 = vpop.f32.mrf.mxu0
        %v579 = vadd.f32 %v566, %v578
        %v580 = vpop.f32.mrf.mxu0
        %581 = vdwg.mxu0
        %582 = vst [vmem:[%s289] sm:$0xff] %v579
        %s583 = sand.u32 %s142, 1
        %s584 = scalar_lea.sflag [#allocation4], %s583
        %s585 = sand.u32 %s142, 1
        %s586 = smul.addr %s585, 8
        %s587 = scalar_lea.vmem [#allocation10], %s586
        // Predicated region
        $region57: #{tpu_custom_call.1} parent=39 // pred_check
          %p588 = pneg %p152
        $region58: #{tpu_custom_call.1} parent=39 // pred_check_branch
          %590 = sbr.rel (%p588) target = $region60
        $region59: #{tpu_custom_call.1} parent=39 // pred_region
          %592 = vsyncadd %s584, 0
          %s593 = smul.addr %s24, 8
          %s594 = scalar_lea.hbm %s5, %s593
          %s596 = sshll.u32 %s587, 4
          %s597 = int_to_ptr.vmem [resolvable:$true] %s596
          %s598 = sshll.u32 %s594, 4
          %s599 = int_to_ptr.hbm [resolvable:$true] %s598
          %601 = dma.vmem_to_hbm [thread:$0]  %s597, 128, %s599, %s584
        $region60: #{tpu_custom_call.1} parent=39 // pred_fallthru
          _
      $region40: #{tpu_custom_call.1} parent=5 // pred_fallthru
        _
      %p602 = scmp.le.s32.totalorder 2, %s19
      // Predicated region
      $region61: #{tpu_custom_call.1} parent=5 // pred_check
        %p603 = pneg %p602
      $region62: #{tpu_custom_call.1} parent=5 // pred_check_branch
        %605 = sbr.rel (%p603) target = $region64
      $region63: #{tpu_custom_call.1} parent=5 // pred_region
        %s606 = ssub.s32 %s19, 2
        // Predicated region
        $region65: #{tpu_custom_call.1} parent=63 // pred_check
          %p607 = pneg %p158
        $region66: #{tpu_custom_call.1} parent=63 // pred_check_branch
          %609 = sbr.rel (%p607) target = $region68
        $region67: #{tpu_custom_call.1} parent=63 // pred_region
          %s610 = sand.u32 %s143, 1
          %s611 = scalar_lea.sflag [#allocation4], %s610
          %s612 = sand.u32 %s143, 1
          %s613 = smul.addr %s612, 8
          %s614 = scalar_lea.vmem [#allocation10], %s613
          %616 = dma.done %s611, 128
        $region68: #{tpu_custom_call.1} parent=63 // pred_fallthru
          _
      $region64: #{tpu_custom_call.1} parent=5 // pred_fallthru
        _
    $region6: #{tpu_custom_call.1} parent=1 // loop_footer
      %s23 = sadd.s32 1, %s19
    $region7: #{tpu_custom_call.1} parent=1 // loop_footer_branch
      %18 = sbr.rel target = $region3
    $region8: #{tpu_custom_call.1} parent=1 // loop_exit
      _
    %617 = vsyncpa [#allocation3], 1
    %s618 = scalar_lea.sflag [#allocation3], 1
    %619 = vsyncpa %s618, 1
    %620 = vsyncpa [#allocation6], 1
    %621 = vsyncpa [#allocation9], 1
    %622 = vsyncpa [#allocation4], 1
    %s623 = scalar_lea.sflag [#allocation4], 1
    %624 = vsyncpa %s623, 1

</llo_original>
